<compile_context>
chip_gen: v5e
topology: v5e:2x2
jax: 0.10.0
libtpu: 0.0.40
codegen_flags: <defaults>
</compile_context>

<pallas_src>
import jax
import jax.numpy as jnp
from jax.experimental import pallas as pl
from jax.experimental.pallas import tpu as pltpu


# ---------------------------------------------------------------------------
# Fused Pallas kernel: num_layers x (conv1d + bias + ReLU) -> global mean/max pool
# ---------------------------------------------------------------------------
def _make_kernel(num_layers, kernel_size, padding, pool, slot, l_final, tb):
    n_masks = (num_layers - 1) if padding > 0 else 0

    def kernel(*refs):
        x_ref = refs[0]
        w_refs = refs[1:1 + num_layers]                                 # (K, Cin_i, Cout_i)
        b_refs = refs[1 + num_layers:1 + 2 * num_layers]                # (1, Cout_i) f32
        m_refs = refs[1 + 2 * num_layers:1 + 2 * num_layers + n_masks]  # (N_j, 1) f32
        sel_ref = refs[1 + 2 * num_layers + n_masks]                    # (TB, n_red) f32
        o_ref = refs[2 + 2 * num_layers + n_masks]                      # (Cout, TB)

        h = x_ref[...]                        # (TB*slot, C_in), input dtype
        cdtype = h.dtype
        for i in range(num_layers):
            w = w_refs[i][...]
            b = b_refs[i][...]
            n_out = h.shape[0] - (kernel_size - 1)
            # Conv1d as K shifted matmuls with the batch tile folded into M (f32 acc).
            acc = jnp.dot(h[0:n_out, :], w[0], preferred_element_type=jnp.float32)
            for k in range(1, kernel_size):
                acc = acc + jnp.dot(h[k:k + n_out, :], w[k],
                                    preferred_element_type=jnp.float32)
            acc = jnp.maximum(acc + b, 0.0)           # bias + ReLU (f32)
            if i < num_layers - 1:
                if n_masks:
                    acc = acc * m_refs[i][...]        # re-zero halo rows (padding > 0)
                h = acc.astype(cdtype)
            else:
                h = acc                               # keep f32 for pooling

        # Global pool over length: combine the l_final shifted views elementwise,
        # then pick row b*slot for every sample b with one small selection matmul.
        # (ReLU output >= 0, so out-of-segment rows never affect the max.)
        n_red = (tb - 1) * slot + 1
        red = h[0:n_red, :]
        for p in range(1, l_final):
            v = h[p:p + n_red, :]
            red = (red + v) if pool == "mean" else jnp.maximum(red, v)
        pooled = jnp.dot(sel_ref[...], red, preferred_element_type=jnp.float32)
        if pool == "mean":
            pooled = pooled * (1.0 / l_final)
        o_ref[...] = pooled.T.astype(o_ref.dtype)     # lane-dense (C_out, TB)

    return kernel


# ---------------------------------------------------------------------------
# Wrapper: PyTorch NCW in, (B, C_out) out
# ---------------------------------------------------------------------------
def global_convolutions_1d(x_ncl, weights_oik, biases, *, kernel_size, padding=0,
                           global_pool_method="mean"):
    """x_ncl: (B, C_in, L).  weights_oik: list of (C_out_i, C_in_i, K) (PyTorch
    Conv1d layout).  biases: list of (C_out_i,).  Returns (B, C_out_final)."""
    if global_pool_method not in ("mean", "max"):
        raise ValueError(f"Unknown global pooling method: '{global_pool_method}'.")
    # TODO(synk): BatchNorm1d (do_batchnorm=True, training-mode batch statistics) is
    # not implemented; the default do_batchnorm=False configuration is reproduced.

    b_, c_in, l_ = x_ncl.shape
    n_layers = len(weights_oik)
    k = kernel_size
    c_out_final = weights_oik[-1].shape[0]

    margin = n_layers * padding                      # zero halo per sample segment
    slot = l_ + 2 * margin                           # per-sample stride in flat layout
    l_final = l_ + n_layers * (2 * padding - k + 1)  # valid length after the stack
    if l_final < 1:
        raise ValueError("Non-positive output length for the given conv stack.")

    # Batch tile: fold TB samples into the matmul M dimension per grid step.
    # (Output block's lane dim must be a multiple of 128 or equal the full dim,
    #  so TB == B_pad when B_pad <= 128, else TB == 128.)
    b_pad8 = ((b_ + 7) // 8) * 8
    if b_pad8 <= 128:
        tb, b_pad = b_pad8, b_pad8
    else:
        tb, b_pad = 128, ((b_ + 127) // 128) * 128
    grid = (b_pad // tb,)

    # Channels-last flat layout: each sample owns `slot` rows; real data sits in the
    # middle with `margin` zero rows on each side (the conv's implicit zero padding).
    x_blc = jnp.transpose(x_ncl, (0, 2, 1))                               # (B, L, C)
    x_blc = jnp.pad(x_blc, ((0, b_pad - b_), (margin, margin), (0, 0)))
    x_flat = jnp.reshape(x_blc, (b_pad * slot, c_in))                     # (B_pad*slot, C)

    args = [x_flat]
    in_specs = [pl.BlockSpec((tb * slot, c_in), lambda i: (i, 0))]

    w3s, b2s, masks = [], [], []
    for w, b in zip(weights_oik, biases):
        # PyTorch (O, I, K) -> (K, I, O): each tap k is a plain (C_in, C_out) matmul.
        w3s.append(jnp.transpose(w, (2, 1, 0)).astype(x_ncl.dtype))
        b2s.append(b.reshape(1, -1).astype(jnp.float32))
    if padding > 0:
        for j in range(n_layers - 1):
            n_j = tb * slot - (j + 1) * (k - 1)           # flat length after layer j
            off_j = margin - (j + 1) * padding            # valid-segment offset in slot
            l_j = l_ + (j + 1) * (2 * padding - k + 1)    # valid length per sample
            pos = jnp.arange(n_j, dtype=jnp.int32) % slot
            m = ((pos >= off_j) & (pos < off_j + l_j)).astype(jnp.float32)
            masks.append(m[:, None])

    # Selection matrix for the pooling epilogue: pooled[b] = combined[b * slot].
    n_red = (tb - 1) * slot + 1
    sel = (jnp.arange(n_red, dtype=jnp.int32)[None, :]
           == (jnp.arange(tb, dtype=jnp.int32) * slot)[:, None]).astype(jnp.float32)

    args += w3s + b2s + masks + [sel]
    in_specs += [pl.BlockSpec(w.shape, lambda i: (0, 0, 0)) for w in w3s]
    in_specs += [pl.BlockSpec(b.shape, lambda i: (0, 0)) for b in b2s]
    in_specs += [pl.BlockSpec(m.shape, lambda i: (0, 0)) for m in masks]
    in_specs += [pl.BlockSpec(sel.shape, lambda i: (0, 0))]

    kernel = _make_kernel(n_layers, k, padding, global_pool_method, slot, l_final, tb)

    out = pl.pallas_call(
        kernel,
        out_shape=jax.ShapeDtypeStruct((c_out_final, b_pad), x_ncl.dtype),
        grid_spec=pltpu.PrefetchScalarGridSpec(
            num_scalar_prefetch=0,
            grid=grid,
            in_specs=in_specs,
            out_specs=pl.BlockSpec((c_out_final, tb), lambda i: (0, i)),
        ),
        compiler_params=pltpu.CompilerParams(
            dimension_semantics=("parallel",),
            vmem_limit_bytes=32 * 1024 * 1024,  # per-tile footprint is ~2 MB; safe on v5e/v6e/v7x
        ),
    )(*args)
    return jnp.transpose(out[:, :b_], (1, 0))             # (B, C_out_final)


# ---------------------------------------------------------------------------
# Pure-JAX reference (matches PyTorch semantics) for verification
# ---------------------------------------------------------------------------
def reference_forward(x_ncl, weights_oik, biases, *, padding, global_pool_method):
    h = x_ncl
    for w, b in zip(weights_oik, biases):
        h = jax.lax.conv_general_dilated(
            h, w, window_strides=(1,), padding=[(padding, padding)],
            dimension_numbers=("NCH", "OIH", "NCH"),
        )
        h = jnp.maximum(h + b[None, :, None], 0.0)
    if global_pool_method == "mean":
        return jnp.mean(h, axis=-1)
    return jnp.max(h, axis=-1)


# ---------------------------------------------------------------------------
# Deterministic PyTorch-style parameter init (kaiming-uniform bounds)
# ---------------------------------------------------------------------------
def init_params(key, in_channels, out_channels, num_layers, kernel_size):
    weights, biases = [], []
    inch = in_channels
    for i in range(num_layers):
        outch = out_channels if i == num_layers - 1 else in_channels
        key, kw, kb = jax.random.split(key, 3)
        bound = 1.0 / jnp.sqrt(inch * kernel_size)
        w = jax.random.uniform(
            kw, (outch, inch, kernel_size), jnp.float32, -bound, bound
        )
        b = jax.random.uniform(kb, (outch,), jnp.float32, -bound, bound)
        weights.append(w)
        biases.append(b)
        inch = outch
    return weights, biases


if __name__ == "__main__":
    key = jax.random.PRNGKey(0)

    configs = [
        # (B, C_in, L, C_out, num_layers, K, padding)
        (2,   4, 16, 8, 2, 3, 0),   # primary small config (padding=0)
        (2,   4, 16, 8, 2, 3, 1),   # padded-conv path (zero margins + masks)
        (130, 4, 16, 8, 2, 3, 0),   # multi-tile grid (TB=128, 2 steps) + batch padding
    ]
    for (B, C_IN, L, C_OUT, NL, K, PAD) in configs:
        key, kx, kp = jax.random.split(key, 3)
        x = jax.random.normal(kx, (B, C_IN, L), dtype=jnp.float32)
        weights, biases = init_params(kp, C_IN, C_OUT, NL, K)
        for pool in ("mean", "max"):
            out = global_convolutions_1d(
                x, weights, biases, kernel_size=K, padding=PAD,
                global_pool_method=pool,
            )
            out = jax.block_until_ready(out)
            ref = reference_forward(
                x, weights, biases, padding=PAD, global_pool_method=pool
            )
            assert out.shape == (B, C_OUT), out.shape
            err = jnp.max(jnp.abs(out - ref))
            assert jnp.allclose(out, ref, rtol=1e-5, atol=1e-5), (
                f"mismatch B={B} pad={PAD} pool={pool}: max err {err}"
            )

    print("KERNEL_OK")
</pallas_src>

<mosaic_0001>
module attributes {stable_mosaic.version = 11 : i64} {
  func.func @kernel(%arg0: i32, %arg1: memref<128x4xf32, #tpu.memory_space<vmem>>, %arg2: memref<3x4x4xf32, #tpu.memory_space<vmem>>, %arg3: memref<3x4x8xf32, #tpu.memory_space<vmem>>, %arg4: memref<1x4xf32, #tpu.memory_space<vmem>>, %arg5: memref<1x8xf32, #tpu.memory_space<vmem>>, %arg6: memref<8x113xf32, #tpu.memory_space<vmem>>, %arg7: memref<8x8xf32, #tpu.memory_space<vmem>>) attributes {dimension_semantics = [#tpu.dimension_semantics<parallel>], iteration_bounds = array<i64: 1>, scalar_prefetch = 0 : i64, scratch_operands = 0 : i64, tpu.core_type = #tpu.core_type<tc>, window_params = [{transform_indices = @transform_0, window_bounds = array<i64: 128, 4>}, {pipeline_mode = #tpu.pipeline_mode<synchronous>, transform_indices = @transform_1, window_bounds = array<i64: 3, 4, 4>}, {pipeline_mode = #tpu.pipeline_mode<synchronous>, transform_indices = @transform_2, window_bounds = array<i64: 3, 4, 8>}, {pipeline_mode = #tpu.pipeline_mode<synchronous>, transform_indices = @transform_3, window_bounds = array<i64: 1, 4>}, {pipeline_mode = #tpu.pipeline_mode<synchronous>, transform_indices = @transform_4, window_bounds = array<i64: 1, 8>}, {pipeline_mode = #tpu.pipeline_mode<synchronous>, transform_indices = @transform_5, window_bounds = array<i64: 8, 113>}, {transform_indices = @transform_6, window_bounds = array<i64: 8, 8>}]} {
    %c0 = arith.constant 0 : index
    %c0_0 = arith.constant 0 : index
    %0 = vector.load %arg1[%c0, %c0_0] : memref<128x4xf32, #tpu.memory_space<vmem>>, vector<128x4xf32>
    %c0_1 = arith.constant 0 : index
    %c0_2 = arith.constant 0 : index
    %c0_3 = arith.constant 0 : index
    %1 = vector.load %arg2[%c0_1, %c0_2, %c0_3] : memref<3x4x4xf32, #tpu.memory_space<vmem>>, vector<3x4x4xf32>
    %c0_4 = arith.constant 0 : index
    %c0_5 = arith.constant 0 : index
    %2 = vector.load %arg4[%c0_4, %c0_5] : memref<1x4xf32, #tpu.memory_space<vmem>>, vector<1x4xf32>
    %3 = vector.extract_strided_slice %0 {offsets = [0, 0], sizes = [126, 4], strides = [1, 1]} : vector<128x4xf32> to vector<126x4xf32>
    %4 = vector.extract_strided_slice %1 {offsets = [0, 0, 0], sizes = [1, 4, 4], strides = [1, 1, 1]} : vector<3x4x4xf32> to vector<1x4x4xf32>
    %5 = vector.shape_cast %4 : vector<1x4x4xf32> to vector<4x4xf32>
    %cst = arith.constant dense<0.000000e+00> : vector<126x4xf32>
    %6 = tpu.matmul %3, %5, %cst {dimension_numbers = #tpu.dot_dimension_numbers<[1], [0], [0], [1], [0, 0, 1, 1], [], []>} : vector<126x4xf32>, vector<4x4xf32>, vector<126x4xf32> -> vector<126x4xf32>
    %7 = vector.extract_strided_slice %0 {offsets = [1, 0], sizes = [126, 4], strides = [1, 1]} : vector<128x4xf32> to vector<126x4xf32>
    %8 = vector.extract_strided_slice %1 {offsets = [1, 0, 0], sizes = [1, 4, 4], strides = [1, 1, 1]} : vector<3x4x4xf32> to vector<1x4x4xf32>
    %9 = vector.shape_cast %8 : vector<1x4x4xf32> to vector<4x4xf32>
    %cst_6 = arith.constant dense<0.000000e+00> : vector<126x4xf32>
    %10 = tpu.matmul %7, %9, %cst_6 {dimension_numbers = #tpu.dot_dimension_numbers<[1], [0], [0], [1], [0, 0, 1, 1], [], []>} : vector<126x4xf32>, vector<4x4xf32>, vector<126x4xf32> -> vector<126x4xf32>
    %11 = arith.addf %6, %10 : vector<126x4xf32>
    %12 = vector.extract_strided_slice %0 {offsets = [2, 0], sizes = [126, 4], strides = [1, 1]} : vector<128x4xf32> to vector<126x4xf32>
    %13 = vector.extract_strided_slice %1 {offsets = [2, 0, 0], sizes = [1, 4, 4], strides = [1, 1, 1]} : vector<3x4x4xf32> to vector<1x4x4xf32>
    %14 = vector.shape_cast %13 : vector<1x4x4xf32> to vector<4x4xf32>
    %cst_7 = arith.constant dense<0.000000e+00> : vector<126x4xf32>
    %15 = tpu.matmul %12, %14, %cst_7 {dimension_numbers = #tpu.dot_dimension_numbers<[1], [0], [0], [1], [0, 0, 1, 1], [], []>} : vector<126x4xf32>, vector<4x4xf32>, vector<126x4xf32> -> vector<126x4xf32>
    %16 = arith.addf %11, %15 : vector<126x4xf32>
    %17 = vector.broadcast %2 : vector<1x4xf32> to vector<126x4xf32>
    %18 = arith.addf %16, %17 : vector<126x4xf32>
    %cst_8 = arith.constant 0.000000e+00 : f32
    %19 = vector.broadcast %cst_8 : f32 to vector<126x4xf32>
    %20 = arith.maximumf %18, %19 : vector<126x4xf32>
    %c0_9 = arith.constant 0 : index
    %c0_10 = arith.constant 0 : index
    %c0_11 = arith.constant 0 : index
    %21 = vector.load %arg3[%c0_9, %c0_10, %c0_11] : memref<3x4x8xf32, #tpu.memory_space<vmem>>, vector<3x4x8xf32>
    %c0_12 = arith.constant 0 : index
    %c0_13 = arith.constant 0 : index
    %22 = vector.load %arg5[%c0_12, %c0_13] : memref<1x8xf32, #tpu.memory_space<vmem>>, vector<1x8xf32>
    %23 = vector.extract_strided_slice %20 {offsets = [0, 0], sizes = [124, 4], strides = [1, 1]} : vector<126x4xf32> to vector<124x4xf32>
    %24 = vector.extract_strided_slice %21 {offsets = [0, 0, 0], sizes = [1, 4, 8], strides = [1, 1, 1]} : vector<3x4x8xf32> to vector<1x4x8xf32>
    %25 = vector.shape_cast %24 : vector<1x4x8xf32> to vector<4x8xf32>
    %cst_14 = arith.constant dense<0.000000e+00> : vector<124x8xf32>
    %26 = tpu.matmul %23, %25, %cst_14 {dimension_numbers = #tpu.dot_dimension_numbers<[1], [0], [0], [1], [0, 0, 1, 1], [], []>} : vector<124x4xf32>, vector<4x8xf32>, vector<124x8xf32> -> vector<124x8xf32>
    %27 = vector.extract_strided_slice %20 {offsets = [1, 0], sizes = [124, 4], strides = [1, 1]} : vector<126x4xf32> to vector<124x4xf32>
    %28 = vector.extract_strided_slice %21 {offsets = [1, 0, 0], sizes = [1, 4, 8], strides = [1, 1, 1]} : vector<3x4x8xf32> to vector<1x4x8xf32>
    %29 = vector.shape_cast %28 : vector<1x4x8xf32> to vector<4x8xf32>
    %cst_15 = arith.constant dense<0.000000e+00> : vector<124x8xf32>
    %30 = tpu.matmul %27, %29, %cst_15 {dimension_numbers = #tpu.dot_dimension_numbers<[1], [0], [0], [1], [0, 0, 1, 1], [], []>} : vector<124x4xf32>, vector<4x8xf32>, vector<124x8xf32> -> vector<124x8xf32>
    %31 = arith.addf %26, %30 : vector<124x8xf32>
    %32 = vector.extract_strided_slice %20 {offsets = [2, 0], sizes = [124, 4], strides = [1, 1]} : vector<126x4xf32> to vector<124x4xf32>
    %33 = vector.extract_strided_slice %21 {offsets = [2, 0, 0], sizes = [1, 4, 8], strides = [1, 1, 1]} : vector<3x4x8xf32> to vector<1x4x8xf32>
    %34 = vector.shape_cast %33 : vector<1x4x8xf32> to vector<4x8xf32>
    %cst_16 = arith.constant dense<0.000000e+00> : vector<124x8xf32>
    %35 = tpu.matmul %32, %34, %cst_16 {dimension_numbers = #tpu.dot_dimension_numbers<[1], [0], [0], [1], [0, 0, 1, 1], [], []>} : vector<124x4xf32>, vector<4x8xf32>, vector<124x8xf32> -> vector<124x8xf32>
    %36 = arith.addf %31, %35 : vector<124x8xf32>
    %37 = vector.broadcast %22 : vector<1x8xf32> to vector<124x8xf32>
    %38 = arith.addf %36, %37 : vector<124x8xf32>
    %cst_17 = arith.constant 0.000000e+00 : f32
    %39 = vector.broadcast %cst_17 : f32 to vector<124x8xf32>
    %40 = arith.maximumf %38, %39 : vector<124x8xf32>
    %41 = vector.extract_strided_slice %40 {offsets = [0, 0], sizes = [113, 8], strides = [1, 1]} : vector<124x8xf32> to vector<113x8xf32>
    %42 = vector.extract_strided_slice %40 {offsets = [1, 0], sizes = [113, 8], strides = [1, 1]} : vector<124x8xf32> to vector<113x8xf32>
    %43 = arith.addf %41, %42 : vector<113x8xf32>
    %44 = vector.extract_strided_slice %40 {offsets = [2, 0], sizes = [113, 8], strides = [1, 1]} : vector<124x8xf32> to vector<113x8xf32>
    %45 = arith.addf %43, %44 : vector<113x8xf32>
    %46 = vector.extract_strided_slice %40 {offsets = [3, 0], sizes = [113, 8], strides = [1, 1]} : vector<124x8xf32> to vector<113x8xf32>
    %47 = arith.addf %45, %46 : vector<113x8xf32>
    %48 = vector.extract_strided_slice %40 {offsets = [4, 0], sizes = [113, 8], strides = [1, 1]} : vector<124x8xf32> to vector<113x8xf32>
    %49 = arith.addf %47, %48 : vector<113x8xf32>
    %50 = vector.extract_strided_slice %40 {offsets = [5, 0], sizes = [113, 8], strides = [1, 1]} : vector<124x8xf32> to vector<113x8xf32>
    %51 = arith.addf %49, %50 : vector<113x8xf32>
    %52 = vector.extract_strided_slice %40 {offsets = [6, 0], sizes = [113, 8], strides = [1, 1]} : vector<124x8xf32> to vector<113x8xf32>
    %53 = arith.addf %51, %52 : vector<113x8xf32>
    %54 = vector.extract_strided_slice %40 {offsets = [7, 0], sizes = [113, 8], strides = [1, 1]} : vector<124x8xf32> to vector<113x8xf32>
    %55 = arith.addf %53, %54 : vector<113x8xf32>
    %56 = vector.extract_strided_slice %40 {offsets = [8, 0], sizes = [113, 8], strides = [1, 1]} : vector<124x8xf32> to vector<113x8xf32>
    %57 = arith.addf %55, %56 : vector<113x8xf32>
    %58 = vector.extract_strided_slice %40 {offsets = [9, 0], sizes = [113, 8], strides = [1, 1]} : vector<124x8xf32> to vector<113x8xf32>
    %59 = arith.addf %57, %58 : vector<113x8xf32>
    %60 = vector.extract_strided_slice %40 {offsets = [10, 0], sizes = [113, 8], strides = [1, 1]} : vector<124x8xf32> to vector<113x8xf32>
    %61 = arith.addf %59, %60 : vector<113x8xf32>
    %62 = vector.extract_strided_slice %40 {offsets = [11, 0], sizes = [113, 8], strides = [1, 1]} : vector<124x8xf32> to vector<113x8xf32>
    %63 = arith.addf %61, %62 : vector<113x8xf32>
    %c0_18 = arith.constant 0 : index
    %c0_19 = arith.constant 0 : index
    %64 = vector.load %arg6[%c0_18, %c0_19] : memref<8x113xf32, #tpu.memory_space<vmem>>, vector<8x113xf32>
    %cst_20 = arith.constant dense<0.000000e+00> : vector<8x8xf32>
    %65 = tpu.matmul %64, %63, %cst_20 {dimension_numbers = #tpu.dot_dimension_numbers<[1], [0], [0], [1], [0, 0, 1, 1], [], []>} : vector<8x113xf32>, vector<113x8xf32>, vector<8x8xf32> -> vector<8x8xf32>
    %cst_21 = arith.constant 0.0833333358 : f32
    %66 = vector.broadcast %cst_21 : f32 to vector<8x8xf32>
    %67 = arith.mulf %65, %66 : vector<8x8xf32>
    %68 = tpu.transpose %67, [1, 0] : vector<8x8xf32> -> vector<8x8xf32>
    %c0_22 = arith.constant 0 : index
    %c0_23 = arith.constant 0 : index
    %69 = vector.load %arg7[%c0_22, %c0_23] : memref<8x8xf32, #tpu.memory_space<vmem>>, vector<8x8xf32>
    tpu.vector_store %arg7[%c0_22, %c0_23], %68 {strides = array<i32>} : memref<8x8xf32, #tpu.memory_space<vmem>>, vector<8x8xf32>,
    return
  }
  func.func @transform_0(%arg0: i32) -> (i32, i32) {
    %c0_i32 = arith.constant 0 : i32
    %c0_i32_0 = arith.constant 0 : i32
    return %arg0, %c0_i32 : i32, i32
  }
  func.func @transform_1(%arg0: i32) -> (i32, i32, i32) {
    %c0_i32 = arith.constant 0 : i32
    %c0_i32_0 = arith.constant 0 : i32
    %c0_i32_1 = arith.constant 0 : i32
    %c0_i32_2 = arith.constant 0 : i32
    return %c0_i32, %c0_i32_0, %c0_i32_1 : i32, i32, i32
  }
  func.func @transform_2(%arg0: i32) -> (i32, i32, i32) {
    %c0_i32 = arith.constant 0 : i32
    %c0_i32_0 = arith.constant 0 : i32
    %c0_i32_1 = arith.constant 0 : i32
    %c0_i32_2 = arith.constant 0 : i32
    return %c0_i32, %c0_i32_0, %c0_i32_1 : i32, i32, i32
  }
  func.func @transform_3(%arg0: i32) -> (i32, i32) {
    %c0_i32 = arith.constant 0 : i32
    %c0_i32_0 = arith.constant 0 : i32
    %c0_i32_1 = arith.constant 0 : i32
    return %c0_i32, %c0_i32_0 : i32, i32
  }
  func.func @transform_4(%arg0: i32) -> (i32, i32) {
    %c0_i32 = arith.constant 0 : i32
    %c0_i32_0 = arith.constant 0 : i32
    %c0_i32_1 = arith.constant 0 : i32
    return %c0_i32, %c0_i32_0 : i32, i32
  }
  func.func @transform_5(%arg0: i32) -> (i32, i32) {
    %c0_i32 = arith.constant 0 : i32
    %c0_i32_0 = arith.constant 0 : i32
    %c0_i32_1 = arith.constant 0 : i32
    return %c0_i32, %c0_i32_0 : i32, i32
  }
  func.func @transform_6(%arg0: i32) -> (i32, i32) {
    %c0_i32 = arith.constant 0 : i32
    %c0_i32_0 = arith.constant 0 : i32
    return %c0_i32, %arg0 : i32, i32
  }
}

</mosaic_0001>

<llo_original>
// kernel: tpu_custom_call.1
$region0: #{tpu_custom_call.1}
  #allocation0 [shape = 'u32[]', space=smem, size = 0x4, offset = 0x4, fixed_abs, tag = 'smem constant byte address 0x4 - core index']
  #allocation1 [shape = 'u32[72,128]{1,0:T(1,128)}', space=vmem, size = 0x9000, scoped, tag = 'internal scratch']
  %s0 = inlined_call_operand.vmem [shape: f32[128,4], index: 0, kind: input, shape index: {}]
  %s1 = inlined_call_operand.vmem [shape: f32[3,4,4], index: 1, kind: input, shape index: {}]
  %s2 = inlined_call_operand.vmem [shape: f32[3,4,8], index: 2, kind: input, shape index: {}]
  %s3 = inlined_call_operand.vmem [shape: f32[1,4], index: 3, kind: input, shape index: {}]
  %s4 = inlined_call_operand.vmem [shape: f32[1,8], index: 4, kind: input, shape index: {}]
  %s5 = inlined_call_operand.vmem [shape: f32[8,113], index: 5, kind: input, shape index: {}]
  %s6 = inlined_call_operand.hbm [shape: f32[8,8], index: 6, kind: output, shape index: {}]
  %s7 = sld [smem:[#allocation0]]
  $region34: #{tpu_custom_call.1} parent=0
    _
  %s9 = ssub.s32 1, %s7
  %s10 = scalar_select 0, %s9, %s7
  $region1: #{tpu_custom_call.1} parent=0
    #allocation2 [shape = 'u8[4096]{0}', space=vmem, size = 0x1000, scoped, tag = 'output window, operand 0, single buffered']
    #allocation3 [shape = 's32[1]{0}', space=sflag, size = 0x4, scoped, tag = 'scoped memory for tpu_custom_call.1']
    %11 = vsyncpa [#allocation3], 0
    // Predicated region
    $region2: #{tpu_custom_call.1} parent=1 // pred_check
      _
    $region3: #{tpu_custom_call.1} parent=1 // pred_check_branch
      %13 = sbr.rel (0) target = $region5
    $region4: #{tpu_custom_call.1} parent=1 // pred_region
      _
    $region5: #{tpu_custom_call.1} parent=1 // pred_fallthru
      _
    // Predicated region
    $region6: #{tpu_custom_call.1} parent=1 // pred_check
      _
    $region7: #{tpu_custom_call.1} parent=1 // pred_check_branch
      %15 = sbr.rel (0) target = $region9
    $region8: #{tpu_custom_call.1} parent=1 // pred_region
      _
    $region9: #{tpu_custom_call.1} parent=1 // pred_fallthru
      _
    // Predicated region
    $region10: #{tpu_custom_call.1} parent=1 // pred_check
      _
    $region11: #{tpu_custom_call.1} parent=1 // pred_check_branch
      %17 = sbr.rel (0) target = $region13
    $region12: #{tpu_custom_call.1} parent=1 // pred_region
      _
    $region13: #{tpu_custom_call.1} parent=1 // pred_fallthru
      _
    // Predicated region
    $region14: #{tpu_custom_call.1} parent=1 // pred_check
      _
    $region15: #{tpu_custom_call.1} parent=1 // pred_check_branch
      %19 = sbr.rel (0) target = $region17
    $region16: #{tpu_custom_call.1} parent=1 // pred_region
      _
    $region17: #{tpu_custom_call.1} parent=1 // pred_fallthru
      _
    // Predicated region
    $region18: #{tpu_custom_call.1} parent=1 // pred_check
      _
    $region19: #{tpu_custom_call.1} parent=1 // pred_check_branch
      %21 = sbr.rel (0) target = $region21
    $region20: #{tpu_custom_call.1} parent=1 // pred_region
      _
    $region21: #{tpu_custom_call.1} parent=1 // pred_fallthru
      _
    // Predicated region
    $region22: #{tpu_custom_call.1} parent=1 // pred_check
      _
    $region23: #{tpu_custom_call.1} parent=1 // pred_check_branch
      %23 = sbr.rel (0) target = $region25
    $region24: #{tpu_custom_call.1} parent=1 // pred_region
      _
    $region25: #{tpu_custom_call.1} parent=1 // pred_fallthru
      _
    %v24 = vld [vmem:[%s0] sm:$0xff]
    %v25 = vld [vmem:[%s0 + $0x8] sm:$0xff]
    %v26 = vld [vmem:[%s0 + $0x10] sm:$0xff]
    %v27 = vld [vmem:[%s0 + $0x18] sm:$0xff]
    %v28 = vld [vmem:[%s0 + $0x20] sm:$0xff]
    %v29 = vld [vmem:[%s0 + $0x28] sm:$0xff]
    %v30 = vld [vmem:[%s0 + $0x30] sm:$0xff]
    %v31 = vld [vmem:[%s0 + $0x38] sm:$0xff]
    %v32 = vld [vmem:[%s0 + $0x40] sm:$0xff]
    %v33 = vld [vmem:[%s0 + $0x48] sm:$0xff]
    %v34 = vld [vmem:[%s0 + $0x50] sm:$0xff]
    %v35 = vld [vmem:[%s0 + $0x58] sm:$0xff]
    %v36 = vld [vmem:[%s0 + $0x60] sm:$0xff]
    %v37 = vld [vmem:[%s0 + $0x68] sm:$0xff]
    %v38 = vld [vmem:[%s0 + $0x70] sm:$0xff]
    %v39 = vld [vmem:[%s0 + $0x78] sm:$0xff]
    %v40 = vld [vmem:[%s1] sm:$0xf]
    %v41 = vld [vmem:[%s1 + $0x4] sm:$0xf]
    %v42 = vld [vmem:[%s1 + $0x8] sm:$0xf]
    %v43 = vld [vmem:[%s3] sm:$0x1]
    %vm60 = vcmask 1046528
    %v61 = vrot.slane %v24, 1
    %v62 = vrot.slane %v25, 1
    %v63 = vsel %vm60, %v61, %v62
    %v64 = vrot.slane %v26, 1
    %v65 = vsel %vm60, %v62, %v64
    %v66 = vrot.slane %v27, 1
    %v67 = vsel %vm60, %v64, %v66
    %v68 = vrot.slane %v28, 1
    %v69 = vsel %vm60, %v66, %v68
    %v70 = vrot.slane %v29, 1
    %v71 = vsel %vm60, %v68, %v70
    %v72 = vrot.slane %v30, 1
    %v73 = vsel %vm60, %v70, %v72
    %v74 = vrot.slane %v31, 1
    %v75 = vsel %vm60, %v72, %v74
    %v76 = vrot.slane %v32, 1
    %v77 = vsel %vm60, %v74, %v76
    %v78 = vrot.slane %v33, 1
    %v79 = vsel %vm60, %v76, %v78
    %v80 = vrot.slane %v34, 1
    %v81 = vsel %vm60, %v78, %v80
    %v82 = vrot.slane %v35, 1
    %v83 = vsel %vm60, %v80, %v82
    %v84 = vrot.slane %v36, 1
    %v85 = vsel %vm60, %v82, %v84
    %v86 = vrot.slane %v37, 1
    %v87 = vsel %vm60, %v84, %v86
    %v88 = vrot.slane %v38, 1
    %v89 = vsel %vm60, %v86, %v88
    %v90 = vrot.slane %v39, 1
    %v91 = vsel %vm60, %v88, %v90
    %vm92 = vcmask 31744
    %v93 = vsel %vm92, %v63, 0
    %v95 = vsel %vm92, %v65, 0
    %v97 = vsel %vm92, %v67, 0
    %v99 = vsel %vm92, %v69, 0
    %v101 = vsel %vm92, %v71, 0
    %v103 = vsel %vm92, %v73, 0
    %v105 = vsel %vm92, %v75, 0
    %v107 = vsel %vm92, %v77, 0
    %v109 = vsel %vm92, %v79, 0
    %v111 = vsel %vm92, %v81, 0
    %v113 = vsel %vm92, %v83, 0
    %v115 = vsel %vm92, %v85, 0
    %v117 = vsel %vm92, %v87, 0
    %v119 = vsel %vm92, %v89, 0
    %v121 = vsel %vm92, %v91, 0
    %v123 = vsel %vm92, %v90, 0
    %vm125 = vcmask 1043456
    %v127 = vsel %vm125, %v41, 0
    %129 = vmatpush.msra.mxu0 0.0
    %130 = vmatpush.msra.mxu0 0.0
    %131 = vmatpush.msra.mxu0 0.0
    %132 = vmatpush.msra.mxu0 0.0
    %133 = vmatpush.msra.mxu0 0.0
    %134 = vmatpush.msra.mxu0 0.0
    %135 = vmatpush.msra.mxu0 0.0
    %136 = vmatpush.msra.mxu0 0.0
    %137 = vmatpush.msra.mxu0 0.0
    %138 = vmatpush.msra.mxu0 0.0
    %139 = vmatpush.msra.mxu0 0.0
    %140 = vmatpush.msra.mxu0 0.0
    %141 = vmatpush.msra.mxu0 0.0
    %142 = vmatpush.msra.mxu0 0.0
    %143 = vmatpush.msra.mxu0 0.0
    %144 = vmatpush.msra.mxu0 %v127
    %145 = vmatmul.f32.gmra.mxu0 %v93
    %v146 = vpop.f32.mrf.mxu0
    %v147 = vadd.f32 0.0, %v146
    %148 = vmatmul.f32.gmra.mxu0 %v95
    %v149 = vpop.f32.mrf.mxu0
    %v150 = vadd.f32 0.0, %v149
    %151 = vmatmul.f32.gmra.mxu0 %v97
    %v152 = vpop.f32.mrf.mxu0
    %v153 = vadd.f32 0.0, %v152
    %154 = vmatmul.f32.gmra.mxu0 %v99
    %v155 = vpop.f32.mrf.mxu0
    %v156 = vadd.f32 0.0, %v155
    %157 = vmatmul.f32.gmra.mxu0 %v101
    %v158 = vpop.f32.mrf.mxu0
    %v159 = vadd.f32 0.0, %v158
    %160 = vmatmul.f32.gmra.mxu0 %v103
    %v161 = vpop.f32.mrf.mxu0
    %v162 = vadd.f32 0.0, %v161
    %163 = vmatmul.f32.gmra.mxu0 %v105
    %v164 = vpop.f32.mrf.mxu0
    %v165 = vadd.f32 0.0, %v164
    %166 = vmatmul.f32.gmra.mxu0 %v107
    %v167 = vpop.f32.mrf.mxu0
    %v168 = vadd.f32 0.0, %v167
    %169 = vmatmul.f32.gmra.mxu0 %v109
    %v170 = vpop.f32.mrf.mxu0
    %v171 = vadd.f32 0.0, %v170
    %172 = vmatmul.f32.gmra.mxu0 %v111
    %v173 = vpop.f32.mrf.mxu0
    %v174 = vadd.f32 0.0, %v173
    %175 = vmatmul.f32.gmra.mxu0 %v113
    %v176 = vpop.f32.mrf.mxu0
    %v177 = vadd.f32 0.0, %v176
    %178 = vmatmul.f32.gmra.mxu0 %v115
    %v179 = vpop.f32.mrf.mxu0
    %v180 = vadd.f32 0.0, %v179
    %181 = vmatmul.f32.gmra.mxu0 %v117
    %v182 = vpop.f32.mrf.mxu0
    %v183 = vadd.f32 0.0, %v182
    %184 = vmatmul.f32.gmra.mxu0 %v119
    %v185 = vpop.f32.mrf.mxu0
    %v186 = vadd.f32 0.0, %v185
    %187 = vmatmul.f32.gmra.mxu0 %v121
    %v188 = vpop.f32.mrf.mxu0
    %v189 = vadd.f32 0.0, %v188
    %190 = vmatmul.f32.gmra.mxu0 %v123
    %v191 = vpop.f32.mrf.mxu0
    %v192 = vadd.f32 0.0, %v191
    %193 = vdwg.mxu0
    %v194 = vsel %vm92, %v24, 0
    %v196 = vsel %vm92, %v25, 0
    %v198 = vsel %vm92, %v26, 0
    %v200 = vsel %vm92, %v27, 0
    %v202 = vsel %vm92, %v28, 0
    %v204 = vsel %vm92, %v29, 0
    %v206 = vsel %vm92, %v30, 0
    %v208 = vsel %vm92, %v31, 0
    %v210 = vsel %vm92, %v32, 0
    %v212 = vsel %vm92, %v33, 0
    %v214 = vsel %vm92, %v34, 0
    %v216 = vsel %vm92, %v35, 0
    %v218 = vsel %vm92, %v36, 0
    %v220 = vsel %vm92, %v37, 0
    %v222 = vsel %vm92, %v38, 0
    %v224 = vsel %vm92, %v39, 0
    %v227 = vsel %vm125, %v40, 0
    %229 = vmatpush.msra.mxu0 0.0
    %230 = vmatpush.msra.mxu0 0.0
    %231 = vmatpush.msra.mxu0 0.0
    %232 = vmatpush.msra.mxu0 0.0
    %233 = vmatpush.msra.mxu0 0.0
    %234 = vmatpush.msra.mxu0 0.0
    %235 = vmatpush.msra.mxu0 0.0
    %236 = vmatpush.msra.mxu0 0.0
    %237 = vmatpush.msra.mxu0 0.0
    %238 = vmatpush.msra.mxu0 0.0
    %239 = vmatpush.msra.mxu0 0.0
    %240 = vmatpush.msra.mxu0 0.0
    %241 = vmatpush.msra.mxu0 0.0
    %242 = vmatpush.msra.mxu0 0.0
    %243 = vmatpush.msra.mxu0 0.0
    %244 = vmatpush.msra.mxu0 %v227
    %245 = vmatmul.f32.gmra.mxu0 %v194
    %v246 = vpop.f32.mrf.mxu0
    %v247 = vadd.f32 %v147, %v246
    %248 = vmatmul.f32.gmra.mxu0 %v196
    %v249 = vpop.f32.mrf.mxu0
    %v250 = vadd.f32 %v150, %v249
    %251 = vmatmul.f32.gmra.mxu0 %v198
    %v252 = vpop.f32.mrf.mxu0
    %v253 = vadd.f32 %v153, %v252
    %254 = vmatmul.f32.gmra.mxu0 %v200
    %v255 = vpop.f32.mrf.mxu0
    %v256 = vadd.f32 %v156, %v255
    %257 = vmatmul.f32.gmra.mxu0 %v202
    %v258 = vpop.f32.mrf.mxu0
    %v259 = vadd.f32 %v159, %v258
    %260 = vmatmul.f32.gmra.mxu0 %v204
    %v261 = vpop.f32.mrf.mxu0
    %v262 = vadd.f32 %v162, %v261
    %263 = vmatmul.f32.gmra.mxu0 %v206
    %v264 = vpop.f32.mrf.mxu0
    %v265 = vadd.f32 %v165, %v264
    %266 = vmatmul.f32.gmra.mxu0 %v208
    %v267 = vpop.f32.mrf.mxu0
    %v268 = vadd.f32 %v168, %v267
    %269 = vmatmul.f32.gmra.mxu0 %v210
    %v270 = vpop.f32.mrf.mxu0
    %v271 = vadd.f32 %v171, %v270
    %272 = vmatmul.f32.gmra.mxu0 %v212
    %v273 = vpop.f32.mrf.mxu0
    %v274 = vadd.f32 %v174, %v273
    %275 = vmatmul.f32.gmra.mxu0 %v214
    %v276 = vpop.f32.mrf.mxu0
    %v277 = vadd.f32 %v177, %v276
    %278 = vmatmul.f32.gmra.mxu0 %v216
    %v279 = vpop.f32.mrf.mxu0
    %v280 = vadd.f32 %v180, %v279
    %281 = vmatmul.f32.gmra.mxu0 %v218
    %v282 = vpop.f32.mrf.mxu0
    %v283 = vadd.f32 %v183, %v282
    %284 = vmatmul.f32.gmra.mxu0 %v220
    %v285 = vpop.f32.mrf.mxu0
    %v286 = vadd.f32 %v186, %v285
    %287 = vmatmul.f32.gmra.mxu0 %v222
    %v288 = vpop.f32.mrf.mxu0
    %v289 = vadd.f32 %v189, %v288
    %290 = vmatmul.f32.gmra.mxu0 %v224
    %v291 = vpop.f32.mrf.mxu0
    %v292 = vadd.f32 %v192, %v291
    %293 = vdwg.mxu0
    %vm294 = vcmask 1045504
    %v295 = vrot.slane %v24, 2
    %v296 = vrot.slane %v25, 2
    %v297 = vsel %vm294, %v295, %v296
    %v298 = vrot.slane %v26, 2
    %v299 = vsel %vm294, %v296, %v298
    %v300 = vrot.slane %v27, 2
    %v301 = vsel %vm294, %v298, %v300
    %v302 = vrot.slane %v28, 2
    %v303 = vsel %vm294, %v300, %v302
    %v304 = vrot.slane %v29, 2
    %v305 = vsel %vm294, %v302, %v304
    %v306 = vrot.slane %v30, 2
    %v307 = vsel %vm294, %v304, %v306
    %v308 = vrot.slane %v31, 2
    %v309 = vsel %vm294, %v306, %v308
    %v310 = vrot.slane %v32, 2
    %v311 = vsel %vm294, %v308, %v310
    %v312 = vrot.slane %v33, 2
    %v313 = vsel %vm294, %v310, %v312
    %v314 = vrot.slane %v34, 2
    %v315 = vsel %vm294, %v312, %v314
    %v316 = vrot.slane %v35, 2
    %v317 = vsel %vm294, %v314, %v316
    %v318 = vrot.slane %v36, 2
    %v319 = vsel %vm294, %v316, %v318
    %v320 = vrot.slane %v37, 2
    %v321 = vsel %vm294, %v318, %v320
    %v322 = vrot.slane %v38, 2
    %v323 = vsel %vm294, %v320, %v322
    %v324 = vrot.slane %v39, 2
    %v325 = vsel %vm294, %v322, %v324
    %v326 = vsel %vm92, %v297, 0
    %v328 = vsel %vm92, %v299, 0
    %v330 = vsel %vm92, %v301, 0
    %v332 = vsel %vm92, %v303, 0
    %v334 = vsel %vm92, %v305, 0
    %v336 = vsel %vm92, %v307, 0
    %v338 = vsel %vm92, %v309, 0
    %v340 = vsel %vm92, %v311, 0
    %v342 = vsel %vm92, %v313, 0
    %v344 = vsel %vm92, %v315, 0
    %v346 = vsel %vm92, %v317, 0
    %v348 = vsel %vm92, %v319, 0
    %v350 = vsel %vm92, %v321, 0
    %v352 = vsel %vm92, %v323, 0
    %v354 = vsel %vm92, %v325, 0
    %v356 = vsel %vm92, %v324, 0
    %v359 = vsel %vm125, %v42, 0
    %361 = vmatpush.msra.mxu0 0.0
    %362 = vmatpush.msra.mxu0 0.0
    %363 = vmatpush.msra.mxu0 0.0
    %364 = vmatpush.msra.mxu0 0.0
    %365 = vmatpush.msra.mxu0 0.0
    %366 = vmatpush.msra.mxu0 0.0
    %367 = vmatpush.msra.mxu0 0.0
    %368 = vmatpush.msra.mxu0 0.0
    %369 = vmatpush.msra.mxu0 0.0
    %370 = vmatpush.msra.mxu0 0.0
    %371 = vmatpush.msra.mxu0 0.0
    %372 = vmatpush.msra.mxu0 0.0
    %373 = vmatpush.msra.mxu0 0.0
    %374 = vmatpush.msra.mxu0 0.0
    %375 = vmatpush.msra.mxu0 0.0
    %376 = vmatpush.msra.mxu0 %v359
    %377 = vmatmul.f32.gmra.mxu0 %v326
    %v378 = vpop.f32.mrf.mxu0
    %v379 = vadd.f32 0.0, %v378
    %380 = vmatmul.f32.gmra.mxu0 %v328
    %v381 = vpop.f32.mrf.mxu0
    %v382 = vadd.f32 0.0, %v381
    %383 = vmatmul.f32.gmra.mxu0 %v330
    %v384 = vpop.f32.mrf.mxu0
    %v385 = vadd.f32 0.0, %v384
    %386 = vmatmul.f32.gmra.mxu0 %v332
    %v387 = vpop.f32.mrf.mxu0
    %v388 = vadd.f32 0.0, %v387
    %389 = vmatmul.f32.gmra.mxu0 %v334
    %v390 = vpop.f32.mrf.mxu0
    %v391 = vadd.f32 0.0, %v390
    %392 = vmatmul.f32.gmra.mxu0 %v336
    %v393 = vpop.f32.mrf.mxu0
    %v394 = vadd.f32 0.0, %v393
    %395 = vmatmul.f32.gmra.mxu0 %v338
    %v396 = vpop.f32.mrf.mxu0
    %v397 = vadd.f32 0.0, %v396
    %398 = vmatmul.f32.gmra.mxu0 %v340
    %v399 = vpop.f32.mrf.mxu0
    %v400 = vadd.f32 0.0, %v399
    %401 = vmatmul.f32.gmra.mxu0 %v342
    %v402 = vpop.f32.mrf.mxu0
    %v403 = vadd.f32 0.0, %v402
    %404 = vmatmul.f32.gmra.mxu0 %v344
    %v405 = vpop.f32.mrf.mxu0
    %v406 = vadd.f32 0.0, %v405
    %407 = vmatmul.f32.gmra.mxu0 %v346
    %v408 = vpop.f32.mrf.mxu0
    %v409 = vadd.f32 0.0, %v408
    %410 = vmatmul.f32.gmra.mxu0 %v348
    %v411 = vpop.f32.mrf.mxu0
    %v412 = vadd.f32 0.0, %v411
    %413 = vmatmul.f32.gmra.mxu0 %v350
    %v414 = vpop.f32.mrf.mxu0
    %v415 = vadd.f32 0.0, %v414
    %416 = vmatmul.f32.gmra.mxu0 %v352
    %v417 = vpop.f32.mrf.mxu0
    %v418 = vadd.f32 0.0, %v417
    %419 = vmatmul.f32.gmra.mxu0 %v354
    %v420 = vpop.f32.mrf.mxu0
    %v421 = vadd.f32 0.0, %v420
    %422 = vmatmul.f32.gmra.mxu0 %v356
    %v423 = vpop.f32.mrf.mxu0
    %v424 = vadd.f32 0.0, %v423
    %425 = vdwg.mxu0
    %v426 = vadd.f32 %v247, %v379
    %v427 = vadd.f32 %v250, %v382
    %v428 = vadd.f32 %v253, %v385
    %v429 = vadd.f32 %v256, %v388
    %v430 = vadd.f32 %v259, %v391
    %v431 = vadd.f32 %v262, %v394
    %v432 = vadd.f32 %v265, %v397
    %v433 = vadd.f32 %v268, %v400
    %v434 = vadd.f32 %v271, %v403
    %v435 = vadd.f32 %v274, %v406
    %v436 = vadd.f32 %v277, %v409
    %v437 = vadd.f32 %v280, %v412
    %v438 = vadd.f32 %v283, %v415
    %v439 = vadd.f32 %v286, %v418
    %v440 = vadd.f32 %v289, %v421
    %v441 = vadd.f32 %v292, %v424
    %v443 = vperm.slane %v43, 0
    %v445 = vadd.f32 %v426, %v443
    %v446 = vadd.f32 %v427, %v443
    %v447 = vadd.f32 %v428, %v443
    %v448 = vadd.f32 %v429, %v443
    %v449 = vadd.f32 %v430, %v443
    %v450 = vadd.f32 %v431, %v443
    %v451 = vadd.f32 %v432, %v443
    %v452 = vadd.f32 %v433, %v443
    %v453 = vadd.f32 %v434, %v443
    %v454 = vadd.f32 %v435, %v443
    %v455 = vadd.f32 %v436, %v443
    %v456 = vadd.f32 %v437, %v443
    %v457 = vadd.f32 %v438, %v443
    %v458 = vadd.f32 %v439, %v443
    %v459 = vadd.f32 %v440, %v443
    %v460 = vadd.f32 %v441, %v443
    %v461 = vmax.f32 %v445, 0.0
    %v462 = vmax.f32 %v446, 0.0
    %v463 = vmax.f32 %v447, 0.0
    %v464 = vmax.f32 %v448, 0.0
    %v465 = vmax.f32 %v449, 0.0
    %v466 = vmax.f32 %v450, 0.0
    %v467 = vmax.f32 %v451, 0.0
    %v468 = vmax.f32 %v452, 0.0
    %v469 = vmax.f32 %v453, 0.0
    %v470 = vmax.f32 %v454, 0.0
    %v471 = vmax.f32 %v455, 0.0
    %v472 = vmax.f32 %v456, 0.0
    %v473 = vmax.f32 %v457, 0.0
    %v474 = vmax.f32 %v458, 0.0
    %v475 = vmax.f32 %v459, 0.0
    %v476 = vmax.f32 %v460, 0.0
    %v477 = vld [vmem:[%s2] sm:$0xf]
    %v478 = vld [vmem:[%s2 + $0x4] sm:$0xf]
    %v479 = vld [vmem:[%s2 + $0x8] sm:$0xf]
    %v480 = vld [vmem:[%s4] sm:$0x1]
    %v497 = vrot.slane %v461, 1
    %v498 = vrot.slane %v462, 1
    %v499 = vsel %vm60, %v497, %v498
    %v500 = vrot.slane %v463, 1
    %v501 = vsel %vm60, %v498, %v500
    %v502 = vrot.slane %v464, 1
    %v503 = vsel %vm60, %v500, %v502
    %v504 = vrot.slane %v465, 1
    %v505 = vsel %vm60, %v502, %v504
    %v506 = vrot.slane %v466, 1
    %v507 = vsel %vm60, %v504, %v506
    %v508 = vrot.slane %v467, 1
    %v509 = vsel %vm60, %v506, %v508
    %v510 = vrot.slane %v468, 1
    %v511 = vsel %vm60, %v508, %v510
    %v512 = vrot.slane %v469, 1
    %v513 = vsel %vm60, %v510, %v512
    %v514 = vrot.slane %v470, 1
    %v515 = vsel %vm60, %v512, %v514
    %v516 = vrot.slane %v471, 1
    %v517 = vsel %vm60, %v514, %v516
    %v518 = vrot.slane %v472, 1
    %v519 = vsel %vm60, %v516, %v518
    %v520 = vrot.slane %v473, 1
    %v521 = vsel %vm60, %v518, %v520
    %v522 = vrot.slane %v474, 1
    %v523 = vsel %vm60, %v520, %v522
    %v524 = vrot.slane %v475, 1
    %v525 = vsel %vm60, %v522, %v524
    %v526 = vrot.slane %v476, 1
    %v527 = vsel %vm60, %v524, %v526
    %v528 = vsel %vm92, %v499, 0
    %v530 = vsel %vm92, %v501, 0
    %v532 = vsel %vm92, %v503, 0
    %v534 = vsel %vm92, %v505, 0
    %v536 = vsel %vm92, %v507, 0
    %v538 = vsel %vm92, %v509, 0
    %v540 = vsel %vm92, %v511, 0
    %v542 = vsel %vm92, %v513, 0
    %v544 = vsel %vm92, %v515, 0
    %v546 = vsel %vm92, %v517, 0
    %v548 = vsel %vm92, %v519, 0
    %v550 = vsel %vm92, %v521, 0
    %v552 = vsel %vm92, %v523, 0
    %v554 = vsel %vm92, %v525, 0
    %v556 = vsel %vm92, %v527, 0
    %v558 = vsel %vm92, %v526, 0
    %v561 = vsel %vm125, %v478, 0
    %563 = vmatpush.msra.mxu0 0.0
    %564 = vmatpush.msra.mxu0 0.0
    %565 = vmatpush.msra.mxu0 0.0
    %566 = vmatpush.msra.mxu0 0.0
    %567 = vmatpush.msra.mxu0 0.0
    %568 = vmatpush.msra.mxu0 0.0
    %569 = vmatpush.msra.mxu0 0.0
    %570 = vmatpush.msra.mxu0 0.0
    %571 = vmatpush.msra.mxu0 0.0
    %572 = vmatpush.msra.mxu0 0.0
    %573 = vmatpush.msra.mxu0 0.0
    %574 = vmatpush.msra.mxu0 0.0
    %575 = vmatpush.msra.mxu0 0.0
    %576 = vmatpush.msra.mxu0 0.0
    %577 = vmatpush.msra.mxu0 0.0
    %578 = vmatpush.msra.mxu0 %v561
    %579 = vmatmul.f32.gmra.mxu0 %v528
    %v580 = vpop.f32.mrf.mxu0
    %v581 = vadd.f32 0.0, %v580
    %582 = vmatmul.f32.gmra.mxu0 %v530
    %v583 = vpop.f32.mrf.mxu0
    %v584 = vadd.f32 0.0, %v583
    %585 = vmatmul.f32.gmra.mxu0 %v532
    %v586 = vpop.f32.mrf.mxu0
    %v587 = vadd.f32 0.0, %v586
    %588 = vmatmul.f32.gmra.mxu0 %v534
    %v589 = vpop.f32.mrf.mxu0
    %v590 = vadd.f32 0.0, %v589
    %591 = vmatmul.f32.gmra.mxu0 %v536
    %v592 = vpop.f32.mrf.mxu0
    %v593 = vadd.f32 0.0, %v592
    %594 = vmatmul.f32.gmra.mxu0 %v538
    %v595 = vpop.f32.mrf.mxu0
    %v596 = vadd.f32 0.0, %v595
    %597 = vmatmul.f32.gmra.mxu0 %v540
    %v598 = vpop.f32.mrf.mxu0
    %v599 = vadd.f32 0.0, %v598
    %600 = vmatmul.f32.gmra.mxu0 %v542
    %v601 = vpop.f32.mrf.mxu0
    %v602 = vadd.f32 0.0, %v601
    %603 = vmatmul.f32.gmra.mxu0 %v544
    %v604 = vpop.f32.mrf.mxu0
    %v605 = vadd.f32 0.0, %v604
    %606 = vmatmul.f32.gmra.mxu0 %v546
    %v607 = vpop.f32.mrf.mxu0
    %v608 = vadd.f32 0.0, %v607
    %609 = vmatmul.f32.gmra.mxu0 %v548
    %v610 = vpop.f32.mrf.mxu0
    %v611 = vadd.f32 0.0, %v610
    %612 = vmatmul.f32.gmra.mxu0 %v550
    %v613 = vpop.f32.mrf.mxu0
    %v614 = vadd.f32 0.0, %v613
    %615 = vmatmul.f32.gmra.mxu0 %v552
    %v616 = vpop.f32.mrf.mxu0
    %v617 = vadd.f32 0.0, %v616
    %618 = vmatmul.f32.gmra.mxu0 %v554
    %v619 = vpop.f32.mrf.mxu0
    %v620 = vadd.f32 0.0, %v619
    %621 = vmatmul.f32.gmra.mxu0 %v556
    %v622 = vpop.f32.mrf.mxu0
    %v623 = vadd.f32 0.0, %v622
    %624 = vmatmul.f32.gmra.mxu0 %v558
    %v625 = vpop.f32.mrf.mxu0
    %v626 = vadd.f32 0.0, %v625
    %627 = vdwg.mxu0
    %v628 = vsel %vm92, %v461, 0
    %v630 = vsel %vm92, %v462, 0
    %v632 = vsel %vm92, %v463, 0
    %v634 = vsel %vm92, %v464, 0
    %v636 = vsel %vm92, %v465, 0
    %v638 = vsel %vm92, %v466, 0
    %v640 = vsel %vm92, %v467, 0
    %v642 = vsel %vm92, %v468, 0
    %v644 = vsel %vm92, %v469, 0
    %v646 = vsel %vm92, %v470, 0
    %v648 = vsel %vm92, %v471, 0
    %v650 = vsel %vm92, %v472, 0
    %v652 = vsel %vm92, %v473, 0
    %v654 = vsel %vm92, %v474, 0
    %v656 = vsel %vm92, %v475, 0
    %v658 = vsel %vm92, %v476, 0
    %v661 = vsel %vm125, %v477, 0
    %663 = vmatpush.msra.mxu0 0.0
    %664 = vmatpush.msra.mxu0 0.0
    %665 = vmatpush.msra.mxu0 0.0
    %666 = vmatpush.msra.mxu0 0.0
    %667 = vmatpush.msra.mxu0 0.0
    %668 = vmatpush.msra.mxu0 0.0
    %669 = vmatpush.msra.mxu0 0.0
    %670 = vmatpush.msra.mxu0 0.0
    %671 = vmatpush.msra.mxu0 0.0
    %672 = vmatpush.msra.mxu0 0.0
    %673 = vmatpush.msra.mxu0 0.0
    %674 = vmatpush.msra.mxu0 0.0
    %675 = vmatpush.msra.mxu0 0.0
    %676 = vmatpush.msra.mxu0 0.0
    %677 = vmatpush.msra.mxu0 0.0
    %678 = vmatpush.msra.mxu0 %v661
    %679 = vmatmul.f32.gmra.mxu0 %v628
    %v680 = vpop.f32.mrf.mxu0
    %v681 = vadd.f32 %v581, %v680
    %682 = vmatmul.f32.gmra.mxu0 %v630
    %v683 = vpop.f32.mrf.mxu0
    %v684 = vadd.f32 %v584, %v683
    %685 = vmatmul.f32.gmra.mxu0 %v632
    %v686 = vpop.f32.mrf.mxu0
    %v687 = vadd.f32 %v587, %v686
    %688 = vmatmul.f32.gmra.mxu0 %v634
    %v689 = vpop.f32.mrf.mxu0
    %v690 = vadd.f32 %v590, %v689
    %691 = vmatmul.f32.gmra.mxu0 %v636
    %v692 = vpop.f32.mrf.mxu0
    %v693 = vadd.f32 %v593, %v692
    %694 = vmatmul.f32.gmra.mxu0 %v638
    %v695 = vpop.f32.mrf.mxu0
    %v696 = vadd.f32 %v596, %v695
    %697 = vmatmul.f32.gmra.mxu0 %v640
    %v698 = vpop.f32.mrf.mxu0
    %v699 = vadd.f32 %v599, %v698
    %700 = vmatmul.f32.gmra.mxu0 %v642
    %v701 = vpop.f32.mrf.mxu0
    %v702 = vadd.f32 %v602, %v701
    %703 = vmatmul.f32.gmra.mxu0 %v644
    %v704 = vpop.f32.mrf.mxu0
    %v705 = vadd.f32 %v605, %v704
    %706 = vmatmul.f32.gmra.mxu0 %v646
    %v707 = vpop.f32.mrf.mxu0
    %v708 = vadd.f32 %v608, %v707
    %709 = vmatmul.f32.gmra.mxu0 %v648
    %v710 = vpop.f32.mrf.mxu0
    %v711 = vadd.f32 %v611, %v710
    %712 = vmatmul.f32.gmra.mxu0 %v650
    %v713 = vpop.f32.mrf.mxu0
    %v714 = vadd.f32 %v614, %v713
    %715 = vmatmul.f32.gmra.mxu0 %v652
    %v716 = vpop.f32.mrf.mxu0
    %v717 = vadd.f32 %v617, %v716
    %718 = vmatmul.f32.gmra.mxu0 %v654
    %v719 = vpop.f32.mrf.mxu0
    %v720 = vadd.f32 %v620, %v719
    %721 = vmatmul.f32.gmra.mxu0 %v656
    %v722 = vpop.f32.mrf.mxu0
    %v723 = vadd.f32 %v623, %v722
    %724 = vmatmul.f32.gmra.mxu0 %v658
    %v725 = vpop.f32.mrf.mxu0
    %v726 = vadd.f32 %v626, %v725
    %727 = vdwg.mxu0
    %v728 = vrot.slane %v461, 2
    %v729 = vrot.slane %v462, 2
    %v730 = vsel %vm294, %v728, %v729
    %v731 = vrot.slane %v463, 2
    %v732 = vsel %vm294, %v729, %v731
    %v733 = vrot.slane %v464, 2
    %v734 = vsel %vm294, %v731, %v733
    %v735 = vrot.slane %v465, 2
    %v736 = vsel %vm294, %v733, %v735
    %v737 = vrot.slane %v466, 2
    %v738 = vsel %vm294, %v735, %v737
    %v739 = vrot.slane %v467, 2
    %v740 = vsel %vm294, %v737, %v739
    %v741 = vrot.slane %v468, 2
    %v742 = vsel %vm294, %v739, %v741
    %v743 = vrot.slane %v469, 2
    %v744 = vsel %vm294, %v741, %v743
    %v745 = vrot.slane %v470, 2
    %v746 = vsel %vm294, %v743, %v745
    %v747 = vrot.slane %v471, 2
    %v748 = vsel %vm294, %v745, %v747
    %v749 = vrot.slane %v472, 2
    %v750 = vsel %vm294, %v747, %v749
    %v751 = vrot.slane %v473, 2
    %v752 = vsel %vm294, %v749, %v751
    %v753 = vrot.slane %v474, 2
    %v754 = vsel %vm294, %v751, %v753
    %v755 = vrot.slane %v475, 2
    %v756 = vsel %vm294, %v753, %v755
    %v757 = vrot.slane %v476, 2
    %v758 = vsel %vm294, %v755, %v757
    %v759 = vsel %vm92, %v730, 0
    %v761 = vsel %vm92, %v732, 0
    %v763 = vsel %vm92, %v734, 0
    %v765 = vsel %vm92, %v736, 0
    %v767 = vsel %vm92, %v738, 0
    %v769 = vsel %vm92, %v740, 0
    %v771 = vsel %vm92, %v742, 0
    %v773 = vsel %vm92, %v744, 0
    %v775 = vsel %vm92, %v746, 0
    %v777 = vsel %vm92, %v748, 0
    %v779 = vsel %vm92, %v750, 0
    %v781 = vsel %vm92, %v752, 0
    %v783 = vsel %vm92, %v754, 0
    %v785 = vsel %vm92, %v756, 0
    %v787 = vsel %vm92, %v758, 0
    %v789 = vsel %vm92, %v757, 0
    %v792 = vsel %vm125, %v479, 0
    %794 = vmatpush.msra.mxu0 0.0
    %795 = vmatpush.msra.mxu0 0.0
    %796 = vmatpush.msra.mxu0 0.0
    %797 = vmatpush.msra.mxu0 0.0
    %798 = vmatpush.msra.mxu0 0.0
    %799 = vmatpush.msra.mxu0 0.0
    %800 = vmatpush.msra.mxu0 0.0
    %801 = vmatpush.msra.mxu0 0.0
    %802 = vmatpush.msra.mxu0 0.0
    %803 = vmatpush.msra.mxu0 0.0
    %804 = vmatpush.msra.mxu0 0.0
    %805 = vmatpush.msra.mxu0 0.0
    %806 = vmatpush.msra.mxu0 0.0
    %807 = vmatpush.msra.mxu0 0.0
    %808 = vmatpush.msra.mxu0 0.0
    %809 = vmatpush.msra.mxu0 %v792
    %810 = vmatmul.f32.gmra.mxu0 %v759
    %v811 = vpop.f32.mrf.mxu0
    %v812 = vadd.f32 0.0, %v811
    %813 = vmatmul.f32.gmra.mxu0 %v761
    %v814 = vpop.f32.mrf.mxu0
    %v815 = vadd.f32 0.0, %v814
    %816 = vmatmul.f32.gmra.mxu0 %v763
    %v817 = vpop.f32.mrf.mxu0
    %v818 = vadd.f32 0.0, %v817
    %819 = vmatmul.f32.gmra.mxu0 %v765
    %v820 = vpop.f32.mrf.mxu0
    %v821 = vadd.f32 0.0, %v820
    %822 = vmatmul.f32.gmra.mxu0 %v767
    %v823 = vpop.f32.mrf.mxu0
    %v824 = vadd.f32 0.0, %v823
    %825 = vmatmul.f32.gmra.mxu0 %v769
    %v826 = vpop.f32.mrf.mxu0
    %v827 = vadd.f32 0.0, %v826
    %828 = vmatmul.f32.gmra.mxu0 %v771
    %v829 = vpop.f32.mrf.mxu0
    %v830 = vadd.f32 0.0, %v829
    %831 = vmatmul.f32.gmra.mxu0 %v773
    %v832 = vpop.f32.mrf.mxu0
    %v833 = vadd.f32 0.0, %v832
    %834 = vmatmul.f32.gmra.mxu0 %v775
    %v835 = vpop.f32.mrf.mxu0
    %v836 = vadd.f32 0.0, %v835
    %837 = vmatmul.f32.gmra.mxu0 %v777
    %v838 = vpop.f32.mrf.mxu0
    %v839 = vadd.f32 0.0, %v838
    %840 = vmatmul.f32.gmra.mxu0 %v779
    %v841 = vpop.f32.mrf.mxu0
    %v842 = vadd.f32 0.0, %v841
    %843 = vmatmul.f32.gmra.mxu0 %v781
    %v844 = vpop.f32.mrf.mxu0
    %v845 = vadd.f32 0.0, %v844
    %846 = vmatmul.f32.gmra.mxu0 %v783
    %v847 = vpop.f32.mrf.mxu0
    %v848 = vadd.f32 0.0, %v847
    %849 = vmatmul.f32.gmra.mxu0 %v785
    %v850 = vpop.f32.mrf.mxu0
    %v851 = vadd.f32 0.0, %v850
    %852 = vmatmul.f32.gmra.mxu0 %v787
    %v853 = vpop.f32.mrf.mxu0
    %v854 = vadd.f32 0.0, %v853
    %855 = vmatmul.f32.gmra.mxu0 %v789
    %v856 = vpop.f32.mrf.mxu0
    %v857 = vadd.f32 0.0, %v856
    %858 = vdwg.mxu0
    %v859 = vadd.f32 %v681, %v812
    %v860 = vadd.f32 %v684, %v815
    %v861 = vadd.f32 %v687, %v818
    %v862 = vadd.f32 %v690, %v821
    %v863 = vadd.f32 %v693, %v824
    %v864 = vadd.f32 %v696, %v827
    %v865 = vadd.f32 %v699, %v830
    %v866 = vadd.f32 %v702, %v833
    %v867 = vadd.f32 %v705, %v836
    %v868 = vadd.f32 %v708, %v839
    %v869 = vadd.f32 %v711, %v842
    %v870 = vadd.f32 %v714, %v845
    %v871 = vadd.f32 %v717, %v848
    %v872 = vadd.f32 %v720, %v851
    %v873 = vadd.f32 %v723, %v854
    %v874 = vadd.f32 %v726, %v857
    %v876 = vperm.slane %v480, 0
    %v878 = vadd.f32 %v859, %v876
    %v879 = vadd.f32 %v860, %v876
    %v880 = vadd.f32 %v861, %v876
    %v881 = vadd.f32 %v862, %v876
    %v882 = vadd.f32 %v863, %v876
    %v883 = vadd.f32 %v864, %v876
    %v884 = vadd.f32 %v865, %v876
    %v885 = vadd.f32 %v866, %v876
    %v886 = vadd.f32 %v867, %v876
    %v887 = vadd.f32 %v868, %v876
    %v888 = vadd.f32 %v869, %v876
    %v889 = vadd.f32 %v870, %v876
    %v890 = vadd.f32 %v871, %v876
    %v891 = vadd.f32 %v872, %v876
    %v892 = vadd.f32 %v873, %v876
    %v893 = vadd.f32 %v874, %v876
    %v894 = vmax.f32 %v878, 0.0
    %v895 = vmax.f32 %v879, 0.0
    %v896 = vmax.f32 %v880, 0.0
    %v897 = vmax.f32 %v881, 0.0
    %v898 = vmax.f32 %v882, 0.0
    %v899 = vmax.f32 %v883, 0.0
    %v900 = vmax.f32 %v884, 0.0
    %v901 = vmax.f32 %v885, 0.0
    %v902 = vmax.f32 %v886, 0.0
    %v903 = vmax.f32 %v887, 0.0
    %v904 = vmax.f32 %v888, 0.0
    %v905 = vmax.f32 %v889, 0.0
    %v906 = vmax.f32 %v890, 0.0
    %v907 = vmax.f32 %v891, 0.0
    %v908 = vmax.f32 %v892, 0.0
    %v909 = vmax.f32 %v893, 0.0
    %v925 = vrot.slane %v894, 1
    %v926 = vrot.slane %v895, 1
    %v927 = vsel %vm60, %v925, %v926
    %v928 = vrot.slane %v896, 1
    %v929 = vsel %vm60, %v926, %v928
    %v930 = vrot.slane %v897, 1
    %v931 = vsel %vm60, %v928, %v930
    %v932 = vrot.slane %v898, 1
    %v933 = vsel %vm60, %v930, %v932
    %v934 = vrot.slane %v899, 1
    %v935 = vsel %vm60, %v932, %v934
    %v936 = vrot.slane %v900, 1
    %v937 = vsel %vm60, %v934, %v936
    %v938 = vrot.slane %v901, 1
    %v939 = vsel %vm60, %v936, %v938
    %v940 = vrot.slane %v902, 1
    %v941 = vsel %vm60, %v938, %v940
    %v942 = vrot.slane %v903, 1
    %v943 = vsel %vm60, %v940, %v942
    %v944 = vrot.slane %v904, 1
    %v945 = vsel %vm60, %v942, %v944
    %v946 = vrot.slane %v905, 1
    %v947 = vsel %vm60, %v944, %v946
    %v948 = vrot.slane %v906, 1
    %v949 = vsel %vm60, %v946, %v948
    %v950 = vrot.slane %v907, 1
    %v951 = vsel %vm60, %v948, %v950
    %v952 = vrot.slane %v908, 1
    %v953 = vsel %vm60, %v950, %v952
    %v969 = vadd.f32 %v894, %v927
    %v970 = vadd.f32 %v895, %v929
    %v971 = vadd.f32 %v896, %v931
    %v972 = vadd.f32 %v897, %v933
    %v973 = vadd.f32 %v898, %v935
    %v974 = vadd.f32 %v899, %v937
    %v975 = vadd.f32 %v900, %v939
    %v976 = vadd.f32 %v901, %v941
    %v977 = vadd.f32 %v902, %v943
    %v978 = vadd.f32 %v903, %v945
    %v979 = vadd.f32 %v904, %v947
    %v980 = vadd.f32 %v905, %v949
    %v981 = vadd.f32 %v906, %v951
    %v982 = vadd.f32 %v907, %v953
    %v983 = vadd.f32 %v908, %v952
    %v984 = vrot.slane %v894, 2
    %v985 = vrot.slane %v895, 2
    %v986 = vsel %vm294, %v984, %v985
    %v987 = vrot.slane %v896, 2
    %v988 = vsel %vm294, %v985, %v987
    %v989 = vrot.slane %v897, 2
    %v990 = vsel %vm294, %v987, %v989
    %v991 = vrot.slane %v898, 2
    %v992 = vsel %vm294, %v989, %v991
    %v993 = vrot.slane %v899, 2
    %v994 = vsel %vm294, %v991, %v993
    %v995 = vrot.slane %v900, 2
    %v996 = vsel %vm294, %v993, %v995
    %v997 = vrot.slane %v901, 2
    %v998 = vsel %vm294, %v995, %v997
    %v999 = vrot.slane %v902, 2
    %v1000 = vsel %vm294, %v997, %v999
    %v1001 = vrot.slane %v903, 2
    %v1002 = vsel %vm294, %v999, %v1001
    %v1003 = vrot.slane %v904, 2
    %v1004 = vsel %vm294, %v1001, %v1003
    %v1005 = vrot.slane %v905, 2
    %v1006 = vsel %vm294, %v1003, %v1005
    %v1007 = vrot.slane %v906, 2
    %v1008 = vsel %vm294, %v1005, %v1007
    %v1009 = vrot.slane %v907, 2
    %v1010 = vsel %vm294, %v1007, %v1009
    %v1011 = vrot.slane %v908, 2
    %v1012 = vsel %vm294, %v1009, %v1011
    %v1028 = vadd.f32 %v969, %v986
    %v1029 = vadd.f32 %v970, %v988
    %v1030 = vadd.f32 %v971, %v990
    %v1031 = vadd.f32 %v972, %v992
    %v1032 = vadd.f32 %v973, %v994
    %v1033 = vadd.f32 %v974, %v996
    %v1034 = vadd.f32 %v975, %v998
    %v1035 = vadd.f32 %v976, %v1000
    %v1036 = vadd.f32 %v977, %v1002
    %v1037 = vadd.f32 %v978, %v1004
    %v1038 = vadd.f32 %v979, %v1006
    %v1039 = vadd.f32 %v980, %v1008
    %v1040 = vadd.f32 %v981, %v1010
    %v1041 = vadd.f32 %v982, %v1012
    %v1042 = vadd.f32 %v983, %v1011
    %vm1043 = vcmask 1044480
    %v1044 = vrot.slane %v894, 3
    %v1045 = vrot.slane %v895, 3
    %v1046 = vsel %vm1043, %v1044, %v1045
    %v1047 = vrot.slane %v896, 3
    %v1048 = vsel %vm1043, %v1045, %v1047
    %v1049 = vrot.slane %v897, 3
    %v1050 = vsel %vm1043, %v1047, %v1049
    %v1051 = vrot.slane %v898, 3
    %v1052 = vsel %vm1043, %v1049, %v1051
    %v1053 = vrot.slane %v899, 3
    %v1054 = vsel %vm1043, %v1051, %v1053
    %v1055 = vrot.slane %v900, 3
    %v1056 = vsel %vm1043, %v1053, %v1055
    %v1057 = vrot.slane %v901, 3
    %v1058 = vsel %vm1043, %v1055, %v1057
    %v1059 = vrot.slane %v902, 3
    %v1060 = vsel %vm1043, %v1057, %v1059
    %v1061 = vrot.slane %v903, 3
    %v1062 = vsel %vm1043, %v1059, %v1061
    %v1063 = vrot.slane %v904, 3
    %v1064 = vsel %vm1043, %v1061, %v1063
    %v1065 = vrot.slane %v905, 3
    %v1066 = vsel %vm1043, %v1063, %v1065
    %v1067 = vrot.slane %v906, 3
    %v1068 = vsel %vm1043, %v1065, %v1067
    %v1069 = vrot.slane %v907, 3
    %v1070 = vsel %vm1043, %v1067, %v1069
    %v1071 = vrot.slane %v908, 3
    %v1072 = vsel %vm1043, %v1069, %v1071
    %v1088 = vadd.f32 %v1028, %v1046
    %v1089 = vadd.f32 %v1029, %v1048
    %v1090 = vadd.f32 %v1030, %v1050
    %v1091 = vadd.f32 %v1031, %v1052
    %v1092 = vadd.f32 %v1032, %v1054
    %v1093 = vadd.f32 %v1033, %v1056
    %v1094 = vadd.f32 %v1034, %v1058
    %v1095 = vadd.f32 %v1035, %v1060
    %v1096 = vadd.f32 %v1036, %v1062
    %v1097 = vadd.f32 %v1037, %v1064
    %v1098 = vadd.f32 %v1038, %v1066
    %v1099 = vadd.f32 %v1039, %v1068
    %v1100 = vadd.f32 %v1040, %v1070
    %v1101 = vadd.f32 %v1041, %v1072
    %v1102 = vadd.f32 %v1042, %v1071
    %v1103 = vrot.slane %v894, 4
    %v1104 = vrot.slane %v895, 4
    %v1105 = vsel %vm125, %v1103, %v1104
    %v1106 = vrot.slane %v896, 4
    %v1107 = vsel %vm125, %v1104, %v1106
    %v1108 = vrot.slane %v897, 4
    %v1109 = vsel %vm125, %v1106, %v1108
    %v1110 = vrot.slane %v898, 4
    %v1111 = vsel %vm125, %v1108, %v1110
    %v1112 = vrot.slane %v899, 4
    %v1113 = vsel %vm125, %v1110, %v1112
    %v1114 = vrot.slane %v900, 4
    %v1115 = vsel %vm125, %v1112, %v1114
    %v1116 = vrot.slane %v901, 4
    %v1117 = vsel %vm125, %v1114, %v1116
    %v1118 = vrot.slane %v902, 4
    %v1119 = vsel %vm125, %v1116, %v1118
    %v1120 = vrot.slane %v903, 4
    %v1121 = vsel %vm125, %v1118, %v1120
    %v1122 = vrot.slane %v904, 4
    %v1123 = vsel %vm125, %v1120, %v1122
    %v1124 = vrot.slane %v905, 4
    %v1125 = vsel %vm125, %v1122, %v1124
    %v1126 = vrot.slane %v906, 4
    %v1127 = vsel %vm125, %v1124, %v1126
    %v1128 = vrot.slane %v907, 4
    %v1129 = vsel %vm125, %v1126, %v1128
    %v1130 = vrot.slane %v908, 4
    %v1131 = vsel %vm125, %v1128, %v1130
    %v1147 = vadd.f32 %v1088, %v1105
    %v1148 = vadd.f32 %v1089, %v1107
    %v1149 = vadd.f32 %v1090, %v1109
    %v1150 = vadd.f32 %v1091, %v1111
    %v1151 = vadd.f32 %v1092, %v1113
    %v1152 = vadd.f32 %v1093, %v1115
    %v1153 = vadd.f32 %v1094, %v1117
    %v1154 = vadd.f32 %v1095, %v1119
    %v1155 = vadd.f32 %v1096, %v1121
    %v1156 = vadd.f32 %v1097, %v1123
    %v1157 = vadd.f32 %v1098, %v1125
    %v1158 = vadd.f32 %v1099, %v1127
    %v1159 = vadd.f32 %v1100, %v1129
    %v1160 = vadd.f32 %v1101, %v1131
    %v1161 = vadd.f32 %v1102, %v1130
    %vm1162 = vcmask 1042432
    %v1163 = vrot.slane %v894, 5
    %v1164 = vrot.slane %v895, 5
    %v1165 = vsel %vm1162, %v1163, %v1164
    %v1166 = vrot.slane %v896, 5
    %v1167 = vsel %vm1162, %v1164, %v1166
    %v1168 = vrot.slane %v897, 5
    %v1169 = vsel %vm1162, %v1166, %v1168
    %v1170 = vrot.slane %v898, 5
    %v1171 = vsel %vm1162, %v1168, %v1170
    %v1172 = vrot.slane %v899, 5
    %v1173 = vsel %vm1162, %v1170, %v1172
    %v1174 = vrot.slane %v900, 5
    %v1175 = vsel %vm1162, %v1172, %v1174
    %v1176 = vrot.slane %v901, 5
    %v1177 = vsel %vm1162, %v1174, %v1176
    %v1178 = vrot.slane %v902, 5
    %v1179 = vsel %vm1162, %v1176, %v1178
    %v1180 = vrot.slane %v903, 5
    %v1181 = vsel %vm1162, %v1178, %v1180
    %v1182 = vrot.slane %v904, 5
    %v1183 = vsel %vm1162, %v1180, %v1182
    %v1184 = vrot.slane %v905, 5
    %v1185 = vsel %vm1162, %v1182, %v1184
    %v1186 = vrot.slane %v906, 5
    %v1187 = vsel %vm1162, %v1184, %v1186
    %v1188 = vrot.slane %v907, 5
    %v1189 = vsel %vm1162, %v1186, %v1188
    %v1190 = vrot.slane %v908, 5
    %v1191 = vsel %vm1162, %v1188, %v1190
    %v1207 = vadd.f32 %v1147, %v1165
    %v1208 = vadd.f32 %v1148, %v1167
    %v1209 = vadd.f32 %v1149, %v1169
    %v1210 = vadd.f32 %v1150, %v1171
    %v1211 = vadd.f32 %v1151, %v1173
    %v1212 = vadd.f32 %v1152, %v1175
    %v1213 = vadd.f32 %v1153, %v1177
    %v1214 = vadd.f32 %v1154, %v1179
    %v1215 = vadd.f32 %v1155, %v1181
    %v1216 = vadd.f32 %v1156, %v1183
    %v1217 = vadd.f32 %v1157, %v1185
    %v1218 = vadd.f32 %v1158, %v1187
    %v1219 = vadd.f32 %v1159, %v1189
    %v1220 = vadd.f32 %v1160, %v1191
    %v1221 = vadd.f32 %v1161, %v1190
    %vm1222 = vcmask 1041408
    %v1223 = vrot.slane %v894, 6
    %v1224 = vrot.slane %v895, 6
    %v1225 = vsel %vm1222, %v1223, %v1224
    %v1226 = vrot.slane %v896, 6
    %v1227 = vsel %vm1222, %v1224, %v1226
    %v1228 = vrot.slane %v897, 6
    %v1229 = vsel %vm1222, %v1226, %v1228
    %v1230 = vrot.slane %v898, 6
    %v1231 = vsel %vm1222, %v1228, %v1230
    %v1232 = vrot.slane %v899, 6
    %v1233 = vsel %vm1222, %v1230, %v1232
    %v1234 = vrot.slane %v900, 6
    %v1235 = vsel %vm1222, %v1232, %v1234
    %v1236 = vrot.slane %v901, 6
    %v1237 = vsel %vm1222, %v1234, %v1236
    %v1238 = vrot.slane %v902, 6
    %v1239 = vsel %vm1222, %v1236, %v1238
    %v1240 = vrot.slane %v903, 6
    %v1241 = vsel %vm1222, %v1238, %v1240
    %v1242 = vrot.slane %v904, 6
    %v1243 = vsel %vm1222, %v1240, %v1242
    %v1244 = vrot.slane %v905, 6
    %v1245 = vsel %vm1222, %v1242, %v1244
    %v1246 = vrot.slane %v906, 6
    %v1247 = vsel %vm1222, %v1244, %v1246
    %v1248 = vrot.slane %v907, 6
    %v1249 = vsel %vm1222, %v1246, %v1248
    %v1250 = vrot.slane %v908, 6
    %v1251 = vsel %vm1222, %v1248, %v1250
    %v1267 = vadd.f32 %v1207, %v1225
    %v1268 = vadd.f32 %v1208, %v1227
    %v1269 = vadd.f32 %v1209, %v1229
    %v1270 = vadd.f32 %v1210, %v1231
    %v1271 = vadd.f32 %v1211, %v1233
    %v1272 = vadd.f32 %v1212, %v1235
    %v1273 = vadd.f32 %v1213, %v1237
    %v1274 = vadd.f32 %v1214, %v1239
    %v1275 = vadd.f32 %v1215, %v1241
    %v1276 = vadd.f32 %v1216, %v1243
    %v1277 = vadd.f32 %v1217, %v1245
    %v1278 = vadd.f32 %v1218, %v1247
    %v1279 = vadd.f32 %v1219, %v1249
    %v1280 = vadd.f32 %v1220, %v1251
    %v1281 = vadd.f32 %v1221, %v1250
    %vm1282 = vcmask 1040384
    %v1283 = vrot.slane %v894, 7
    %v1284 = vrot.slane %v895, 7
    %v1285 = vsel %vm1282, %v1283, %v1284
    %v1286 = vrot.slane %v896, 7
    %v1287 = vsel %vm1282, %v1284, %v1286
    %v1288 = vrot.slane %v897, 7
    %v1289 = vsel %vm1282, %v1286, %v1288
    %v1290 = vrot.slane %v898, 7
    %v1291 = vsel %vm1282, %v1288, %v1290
    %v1292 = vrot.slane %v899, 7
    %v1293 = vsel %vm1282, %v1290, %v1292
    %v1294 = vrot.slane %v900, 7
    %v1295 = vsel %vm1282, %v1292, %v1294
    %v1296 = vrot.slane %v901, 7
    %v1297 = vsel %vm1282, %v1294, %v1296
    %v1298 = vrot.slane %v902, 7
    %v1299 = vsel %vm1282, %v1296, %v1298
    %v1300 = vrot.slane %v903, 7
    %v1301 = vsel %vm1282, %v1298, %v1300
    %v1302 = vrot.slane %v904, 7
    %v1303 = vsel %vm1282, %v1300, %v1302
    %v1304 = vrot.slane %v905, 7
    %v1305 = vsel %vm1282, %v1302, %v1304
    %v1306 = vrot.slane %v906, 7
    %v1307 = vsel %vm1282, %v1304, %v1306
    %v1308 = vrot.slane %v907, 7
    %v1309 = vsel %vm1282, %v1306, %v1308
    %v1310 = vrot.slane %v908, 7
    %v1311 = vsel %vm1282, %v1308, %v1310
    %v1327 = vadd.f32 %v1267, %v1285
    %v1328 = vadd.f32 %v1268, %v1287
    %v1329 = vadd.f32 %v1269, %v1289
    %v1330 = vadd.f32 %v1270, %v1291
    %v1331 = vadd.f32 %v1271, %v1293
    %v1332 = vadd.f32 %v1272, %v1295
    %v1333 = vadd.f32 %v1273, %v1297
    %v1334 = vadd.f32 %v1274, %v1299
    %v1335 = vadd.f32 %v1275, %v1301
    %v1336 = vadd.f32 %v1276, %v1303
    %v1337 = vadd.f32 %v1277, %v1305
    %v1338 = vadd.f32 %v1278, %v1307
    %v1339 = vadd.f32 %v1279, %v1309
    %v1340 = vadd.f32 %v1280, %v1311
    %v1341 = vadd.f32 %v1281, %v1310
    %v1342 = vadd.f32 %v1327, %v895
    %v1343 = vadd.f32 %v1328, %v896
    %v1344 = vadd.f32 %v1329, %v897
    %v1345 = vadd.f32 %v1330, %v898
    %v1346 = vadd.f32 %v1331, %v899
    %v1347 = vadd.f32 %v1332, %v900
    %v1348 = vadd.f32 %v1333, %v901
    %v1349 = vadd.f32 %v1334, %v902
    %v1350 = vadd.f32 %v1335, %v903
    %v1351 = vadd.f32 %v1336, %v904
    %v1352 = vadd.f32 %v1337, %v905
    %v1353 = vadd.f32 %v1338, %v906
    %v1354 = vadd.f32 %v1339, %v907
    %v1355 = vadd.f32 %v1340, %v908
    %v1356 = vadd.f32 %v1341, %v909
    %v1358 = vrot.slane %v909, 1
    %v1359 = vsel %vm60, %v952, %v1358
    %v1362 = vadd.f32 %v1342, %v929
    %v1363 = vadd.f32 %v1343, %v931
    %v1364 = vadd.f32 %v1344, %v933
    %v1365 = vadd.f32 %v1345, %v935
    %v1366 = vadd.f32 %v1346, %v937
    %v1367 = vadd.f32 %v1347, %v939
    %v1368 = vadd.f32 %v1348, %v941
    %v1369 = vadd.f32 %v1349, %v943
    %v1370 = vadd.f32 %v1350, %v945
    %v1371 = vadd.f32 %v1351, %v947
    %v1372 = vadd.f32 %v1352, %v949
    %v1373 = vadd.f32 %v1353, %v951
    %v1374 = vadd.f32 %v1354, %v953
    %v1375 = vadd.f32 %v1355, %v1359
    %v1376 = vadd.f32 %v1356, %v1358
    %v1377 = vrot.slane %v909, 2
    %v1378 = vsel %vm294, %v1011, %v1377
    %v1381 = vadd.f32 %v1362, %v988
    %v1382 = vadd.f32 %v1363, %v990
    %v1383 = vadd.f32 %v1364, %v992
    %v1384 = vadd.f32 %v1365, %v994
    %v1385 = vadd.f32 %v1366, %v996
    %v1386 = vadd.f32 %v1367, %v998
    %v1387 = vadd.f32 %v1368, %v1000
    %v1388 = vadd.f32 %v1369, %v1002
    %v1389 = vadd.f32 %v1370, %v1004
    %v1390 = vadd.f32 %v1371, %v1006
    %v1391 = vadd.f32 %v1372, %v1008
    %v1392 = vadd.f32 %v1373, %v1010
    %v1393 = vadd.f32 %v1374, %v1012
    %v1394 = vadd.f32 %v1375, %v1378
    %v1395 = vadd.f32 %v1376, %v1377
    %v1396 = vrot.slane %v909, 3
    %v1397 = vsel %vm1043, %v1071, %v1396
    %v1400 = vadd.f32 %v1381, %v1048
    %v1401 = vadd.f32 %v1382, %v1050
    %v1402 = vadd.f32 %v1383, %v1052
    %v1403 = vadd.f32 %v1384, %v1054
    %v1404 = vadd.f32 %v1385, %v1056
    %v1405 = vadd.f32 %v1386, %v1058
    %v1406 = vadd.f32 %v1387, %v1060
    %v1407 = vadd.f32 %v1388, %v1062
    %v1408 = vadd.f32 %v1389, %v1064
    %v1409 = vadd.f32 %v1390, %v1066
    %v1410 = vadd.f32 %v1391, %v1068
    %v1411 = vadd.f32 %v1392, %v1070
    %v1412 = vadd.f32 %v1393, %v1072
    %v1413 = vadd.f32 %v1394, %v1397
    %v1414 = vadd.f32 %v1395, %v1396
    %v1415 = vld [vmem:[%s5] sm:$0xff]
    %vm1416 = vcmask 924672
    %v1418 = vsel %vm1416, %v1415, 0
    %v1421 = vsel %vm1282, %v1414, 0
    %1423 = vmatpush.msra.mxu0 0.0
    %1424 = vmatpush.msra.mxu0 %v1421
    %1425 = vmatpush.msra.mxu0 %v1413
    %1426 = vmatpush.msra.mxu0 %v1412
    %1427 = vmatpush.msra.mxu0 %v1411
    %1428 = vmatpush.msra.mxu0 %v1410
    %1429 = vmatpush.msra.mxu0 %v1409
    %1430 = vmatpush.msra.mxu0 %v1408
    %1431 = vmatpush.msra.mxu0 %v1407
    %1432 = vmatpush.msra.mxu0 %v1406
    %1433 = vmatpush.msra.mxu0 %v1405
    %1434 = vmatpush.msra.mxu0 %v1404
    %1435 = vmatpush.msra.mxu0 %v1403
    %1436 = vmatpush.msra.mxu0 %v1402
    %1437 = vmatpush.msra.mxu0 %v1401
    %1438 = vmatpush.msra.mxu0 %v1400
    %1439 = vmatmul.f32.gmra.mxu0 %v1418
    %v1440 = vpop.f32.mrf.mxu0
    %v1441 = vadd.f32 0.0, %v1440
    %1442 = vdwg.mxu0
    %v1443 = vmul.f32 %v1441, 0.083333336
    %1444 = vxpose.xlu0.b32.start [1/16] %v1443, 128
    %1445 = vxpose.xlu0.b32.cont [2/16] 0.0, 128
    %1446 = vxpose.xlu0.b32.cont [3/16] 0.0, 128
    %1447 = vxpose.xlu0.b32.cont [4/16] 0.0, 128
    %1448 = vxpose.xlu0.b32.cont [5/16] 0.0, 128
    %1449 = vxpose.xlu0.b32.cont [6/16] 0.0, 128
    %1450 = vxpose.xlu0.b32.cont [7/16] 0.0, 128
    %1451 = vxpose.xlu0.b32.cont [8/16] 0.0, 128
    %1452 = vxpose.xlu0.b32.cont [9/16] 0.0, 128
    %1453 = vxpose.xlu0.b32.cont [10/16] 0.0, 128
    %1454 = vxpose.xlu0.b32.cont [11/16] 0.0, 128
    %1455 = vxpose.xlu0.b32.cont [12/16] 0.0, 128
    %1456 = vxpose.xlu0.b32.cont [13/16] 0.0, 128
    %1457 = vxpose.xlu0.b32.cont [14/16] 0.0, 128
    %1458 = vxpose.xlu0.b32.cont [15/16] 0.0, 128
    %1459 = vxpose.xlu0.b32.end [16/16] 0.0, 128
    %v1460 = vpop.trf.xlu0
    %v1461 = vpop.trf.xlu0
    %v1462 = vpop.trf.xlu0
    %v1463 = vpop.trf.xlu0
    %v1464 = vpop.trf.xlu0
    %v1465 = vpop.trf.xlu0
    %v1466 = vpop.trf.xlu0
    %v1467 = vpop.trf.xlu0
    %v1468 = vpop.trf.xlu0
    %v1469 = vpop.trf.xlu0
    %v1470 = vpop.trf.xlu0
    %v1471 = vpop.trf.xlu0
    %v1472 = vpop.trf.xlu0
    %v1473 = vpop.trf.xlu0
    %v1474 = vpop.trf.xlu0
    %v1475 = vpop.trf.xlu0
    %vm1476 = vcmask 64512
    %1477 = vst.msk [vmem:[#allocation2] sm:$0xff] %vm1476, %v1460
    // Predicated region
    $region26: #{tpu_custom_call.1} parent=1 // pred_check
      _
    $region27: #{tpu_custom_call.1} parent=1 // pred_check_branch
      %1479 = sbr.rel (0) target = $region29
    $region28: #{tpu_custom_call.1} parent=1 // pred_region
      %1481 = vsyncadd [#allocation3], 0
      %s1483 = sshll.u32 [#allocation2], 4
      %s1484 = int_to_ptr.vmem [resolvable:$true] %s1483
      %s1485 = sshll.u32 %s6, 4
      %s1486 = int_to_ptr.hbm [resolvable:$true] %s1485
      %1488 = dma.vmem_to_hbm [thread:$0]  %s1484, 128, %s1486, [#allocation3]
    $region29: #{tpu_custom_call.1} parent=1 // pred_fallthru
      _
    // Predicated region
    $region30: #{tpu_custom_call.1} parent=1 // pred_check
      _
    $region31: #{tpu_custom_call.1} parent=1 // pred_check_branch
      %1490 = sbr.rel (0) target = $region33
    $region32: #{tpu_custom_call.1} parent=1 // pred_region
      %1492 = dma.done [#allocation3], 128
    $region33: #{tpu_custom_call.1} parent=1 // pred_fallthru
      _
    %1493 = vsyncpa [#allocation3], 1

</llo_original>
